<compile_context>
chip_gen: v5e
topology: v5e:2x2
jax: 0.10.0
libtpu: 0.0.40
codegen_flags: <defaults>
</compile_context>

<pallas_src>
import jax
import jax.numpy as jnp
from jax.experimental import pallas as pl
from jax.experimental.pallas import tpu as pltpu

LANE = 128
H1, H2, H3 = 256, 256, 64
SP, H3P, AP = LANE, LANE, LANE              # padded s_dim / h3 / a_dim (lane-dense)
# packed weight slab row offsets: [w1; w2; w3; wq]
R1, R2, R3, RQ = 0, SP, SP + H1, SP + H1 + H2
RTOT = SP + H1 + H2 + H3P                   # 768 rows, 256 cols


def ddqn_forward_kernel(x_ref, w_ref, b_ref, o_ref):
    # x_ref: [B, 128]  f32   state, zero-padded to lane width
    # w_ref: [768, 256] bf16 packed [w1; w2; w3; wq] (wq = wa + wv, zero-padded)
    # b_ref: [8, 256]  f32   rows 0..3 = b1, b2, b3(pad), bq(pad)
    # o_ref: [B, 128]  f32   lane-dense Q (cols >= a_dim are zero)
    b = b_ref[...]
    x = x_ref[...].astype(jnp.bfloat16)

    w1 = w_ref[R1:R1 + SP, :]                                   # (128, 256)
    h1 = jnp.dot(x, w1, preferred_element_type=jnp.float32) + b[0:1, :]
    h1 = jnp.maximum(h1, 0.0)

    w2 = w_ref[R2:R2 + H1, :]                                   # (256, 256)
    h2 = jnp.dot(h1.astype(jnp.bfloat16), w2,
                 preferred_element_type=jnp.float32) + b[1:2, :]
    h2 = jnp.maximum(h2, 0.0)

    w3 = w_ref[R3:R3 + H2, :H3P]                                # (256, 128)
    h3 = jnp.dot(h2.astype(jnp.bfloat16), w3,
                 preferred_element_type=jnp.float32) + b[2:3, :H3P]
    h3 = jnp.maximum(h3, 0.0)

    wq = w_ref[RQ:RQ + H3P, :AP]                                # (128, 128) fused adv+val head
    o_ref[...] = jnp.dot(h3.astype(jnp.bfloat16), wq,
                         preferred_element_type=jnp.float32) + b[3:4, :AP]


def pack_ddqn_params(params, s_dim, a_dim):
    """Fold value head into advantage head; pack weights (bf16) and biases (f32) into slabs."""
    assert s_dim <= SP and a_dim <= AP
    wq = params["wa"] + params["wv"]            # (H3, a_dim): wv's single column broadcast
    bq = params["ba"] + params["bv"]            # (1, a_dim)

    w = jnp.zeros((RTOT, H1), jnp.float32)
    w = w.at[R1:R1 + s_dim, :H1].set(params["w1"])
    w = w.at[R2:R2 + H1, :H2].set(params["w2"])
    w = w.at[R3:R3 + H2, :H3].set(params["w3"])
    w = w.at[RQ:RQ + H3, :a_dim].set(wq)
    w = w.astype(jnp.bfloat16)

    bias = jnp.zeros((8, H1), jnp.float32)
    bias = bias.at[0, :H1].set(params["b1"][0])
    bias = bias.at[1, :H2].set(params["b2"][0])
    bias = bias.at[2, :H3].set(params["b3"][0])
    bias = bias.at[3, :a_dim].set(bq[0])
    return w, bias


def ddqn_forward(x, packed_w, packed_b, a_dim):
    """x: [B, s_dim] f32. Returns Q: [B, a_dim] f32."""
    B, s_dim = x.shape
    x_pad = jnp.zeros((B, SP), jnp.float32).at[:, :s_dim].set(x)

    out = pl.pallas_call(
        ddqn_forward_kernel,
        out_shape=jax.ShapeDtypeStruct((B, AP), jnp.float32),
        in_specs=[pl.BlockSpec(memory_space=pltpu.MemorySpace.VMEM)] * 3,
        out_specs=pl.BlockSpec(memory_space=pltpu.MemorySpace.VMEM),
    )(x_pad, packed_w, packed_b)
    return out[:, :a_dim]


def init_ddqn_params(key, s_dim, a_dim):
    """PyTorch-Linear-shaped layers stored as (in, out) so kernel computes x @ W + b."""
    ks = jax.random.split(key, 10)

    def lin(kw, kb, fan_in, fan_out):
        bound = 1.0 / jnp.sqrt(float(fan_in))
        w = jax.random.uniform(kw, (fan_in, fan_out), jnp.float32, -bound, bound)
        b = jax.random.uniform(kb, (1, fan_out), jnp.float32, -bound, bound)
        return w, b

    w1, b1 = lin(ks[0], ks[1], s_dim, H1)
    w2, b2 = lin(ks[2], ks[3], H1, H2)
    w3, b3 = lin(ks[4], ks[5], H2, H3)
    wa, ba = lin(ks[6], ks[7], H3, a_dim)
    wv, bv = lin(ks[8], ks[9], H3, 1)
    return dict(w1=w1, b1=b1, w2=w2, b2=b2, w3=w3, b3=b3,
                wa=wa, ba=ba, wv=wv, bv=bv)


def ddqn_forward_ref_packed(x, packed_w, packed_b, s_dim, a_dim):
    """Pure-JAX reference with the SAME numerics as the kernel (bf16 weights, f32 accumulate)."""
    B = x.shape[0]
    x_pad = jnp.zeros((B, SP), jnp.float32).at[:, :s_dim].set(x)
    w = packed_w.astype(jnp.float32)
    b = packed_b

    def bf(v):
        return v.astype(jnp.bfloat16).astype(jnp.float32)

    h1 = jnp.maximum(bf(x_pad) @ w[R1:R1 + SP, :] + b[0:1, :], 0.0)
    h2 = jnp.maximum(bf(h1) @ w[R2:R2 + H1, :] + b[1:2, :], 0.0)
    h3 = jnp.maximum(bf(h2) @ w[R3:R3 + H2, :H3P] + b[2:3, :H3P], 0.0)
    q = bf(h3) @ w[RQ:RQ + H3P, :AP] + b[3:4, :AP]
    return q[:, :a_dim]


def ddqn_forward_ref_f32(x, p):
    """Original PyTorch-module semantics (Q = adv + val, no mean-advantage subtraction)."""
    h1 = jnp.maximum(x @ p["w1"] + p["b1"], 0.0)
    h2 = jnp.maximum(h1 @ p["w2"] + p["b2"], 0.0)
    h3 = jnp.maximum(h2 @ p["w3"] + p["b3"], 0.0)
    return (h3 @ p["wa"] + p["ba"]) + (h3 @ p["wv"] + p["bv"])


if __name__ == "__main__":
    key = jax.random.PRNGKey(0)
    k_x, k_p = jax.random.split(key)

    batch, s_dim, a_dim = 2, 8, 4            # small shapes consistent with DDQN(s_dim, a_dim, gamma)
    x = jax.random.normal(k_x, (batch, s_dim), dtype=jnp.float32)
    params = init_ddqn_params(k_p, s_dim, a_dim)

    packed_w, packed_b = pack_ddqn_params(params, s_dim, a_dim)
    out = jax.block_until_ready(ddqn_forward(x, packed_w, packed_b, a_dim))

    ref_exact = ddqn_forward_ref_packed(x, packed_w, packed_b, s_dim, a_dim)
    ref_f32 = ddqn_forward_ref_f32(x, params)

    assert out.shape == (batch, a_dim)
    # matches kernel numerics (bf16 weights, f32 accumulation)
    assert jnp.allclose(out, ref_exact, atol=1e-4, rtol=1e-4)
    # sanity vs full-f32 PyTorch semantics (loose tolerance for bf16 weight cast)
    assert jnp.allclose(out, ref_f32, atol=5e-2, rtol=5e-2)

    print("KERNEL_OK")
</pallas_src>

<mosaic_0001>
module attributes {stable_mosaic.version = 11 : i64} {
  func.func @ddqn_forward_kernel(%arg0: memref<2x128xf32, #tpu.memory_space<vmem>>, %arg1: memref<768x256xbf16, #tpu.memory_space<vmem>>, %arg2: memref<8x256xf32, #tpu.memory_space<vmem>>, %arg3: memref<2x128xf32, #tpu.memory_space<vmem>>) attributes {dimension_semantics = [], scalar_prefetch = 0 : i64, scratch_operands = 0 : i64, tpu.core_type = #tpu.core_type<tc>} {
    %c0 = arith.constant 0 : index
    %c0_0 = arith.constant 0 : index
    %0 = vector.load %arg2[%c0, %c0_0] : memref<8x256xf32, #tpu.memory_space<vmem>>, vector<8x256xf32>
    %c0_1 = arith.constant 0 : index
    %c0_2 = arith.constant 0 : index
    %1 = vector.load %arg0[%c0_1, %c0_2] : memref<2x128xf32, #tpu.memory_space<vmem>>, vector<2x128xf32>
    %2 = arith.truncf %1 : vector<2x128xf32> to vector<2x128xbf16>
    %c0_3 = arith.constant 0 : index
    %c0_4 = arith.constant 0 : index
    %3 = vector.load %arg1[%c0_3, %c0_4] : memref<768x256xbf16, #tpu.memory_space<vmem>>, vector<128x256xbf16>
    %cst = arith.constant dense<0.000000e+00> : vector<2x256xf32>
    %4 = tpu.matmul %2, %3, %cst {dimension_numbers = #tpu.dot_dimension_numbers<[1], [0], [0], [1], [0, 0, 1, 1], [], []>} : vector<2x128xbf16>, vector<128x256xbf16>, vector<2x256xf32> -> vector<2x256xf32>
    %5 = vector.extract_strided_slice %0 {offsets = [0, 0], sizes = [1, 256], strides = [1, 1]} : vector<8x256xf32> to vector<1x256xf32>
    %6 = vector.broadcast %5 : vector<1x256xf32> to vector<2x256xf32>
    %7 = arith.addf %4, %6 : vector<2x256xf32>
    %cst_5 = arith.constant 0.000000e+00 : f32
    %8 = vector.broadcast %cst_5 : f32 to vector<2x256xf32>
    %9 = arith.maximumf %7, %8 : vector<2x256xf32>
    %c128 = arith.constant 128 : index
    %c0_6 = arith.constant 0 : index
    %10 = vector.load %arg1[%c128, %c0_6] : memref<768x256xbf16, #tpu.memory_space<vmem>>, vector<256x256xbf16>
    %11 = arith.truncf %9 : vector<2x256xf32> to vector<2x256xbf16>
    %cst_7 = arith.constant dense<0.000000e+00> : vector<2x256xf32>
    %12 = tpu.matmul %11, %10, %cst_7 {dimension_numbers = #tpu.dot_dimension_numbers<[1], [0], [0], [1], [0, 0, 1, 1], [], []>} : vector<2x256xbf16>, vector<256x256xbf16>, vector<2x256xf32> -> vector<2x256xf32>
    %13 = vector.extract_strided_slice %0 {offsets = [1, 0], sizes = [1, 256], strides = [1, 1]} : vector<8x256xf32> to vector<1x256xf32>
    %14 = vector.broadcast %13 : vector<1x256xf32> to vector<2x256xf32>
    %15 = arith.addf %12, %14 : vector<2x256xf32>
    %cst_8 = arith.constant 0.000000e+00 : f32
    %16 = vector.broadcast %cst_8 : f32 to vector<2x256xf32>
    %17 = arith.maximumf %15, %16 : vector<2x256xf32>
    %c384 = arith.constant 384 : index
    %c0_9 = arith.constant 0 : index
    %18 = vector.load %arg1[%c384, %c0_9] : memref<768x256xbf16, #tpu.memory_space<vmem>>, vector<256x128xbf16>
    %19 = arith.truncf %17 : vector<2x256xf32> to vector<2x256xbf16>
    %cst_10 = arith.constant dense<0.000000e+00> : vector<2x128xf32>
    %20 = tpu.matmul %19, %18, %cst_10 {dimension_numbers = #tpu.dot_dimension_numbers<[1], [0], [0], [1], [0, 0, 1, 1], [], []>} : vector<2x256xbf16>, vector<256x128xbf16>, vector<2x128xf32> -> vector<2x128xf32>
    %21 = vector.extract_strided_slice %0 {offsets = [2, 0], sizes = [1, 128], strides = [1, 1]} : vector<8x256xf32> to vector<1x128xf32>
    %22 = vector.broadcast %21 : vector<1x128xf32> to vector<2x128xf32>
    %23 = arith.addf %20, %22 : vector<2x128xf32>
    %cst_11 = arith.constant 0.000000e+00 : f32
    %24 = vector.broadcast %cst_11 : f32 to vector<2x128xf32>
    %25 = arith.maximumf %23, %24 : vector<2x128xf32>
    %c640 = arith.constant 640 : index
    %c0_12 = arith.constant 0 : index
    %26 = vector.load %arg1[%c640, %c0_12] : memref<768x256xbf16, #tpu.memory_space<vmem>>, vector<128x128xbf16>
    %27 = arith.truncf %25 : vector<2x128xf32> to vector<2x128xbf16>
    %cst_13 = arith.constant dense<0.000000e+00> : vector<2x128xf32>
    %28 = tpu.matmul %27, %26, %cst_13 {dimension_numbers = #tpu.dot_dimension_numbers<[1], [0], [0], [1], [0, 0, 1, 1], [], []>} : vector<2x128xbf16>, vector<128x128xbf16>, vector<2x128xf32> -> vector<2x128xf32>
    %29 = vector.extract_strided_slice %0 {offsets = [3, 0], sizes = [1, 128], strides = [1, 1]} : vector<8x256xf32> to vector<1x128xf32>
    %30 = vector.broadcast %29 : vector<1x128xf32> to vector<2x128xf32>
    %31 = arith.addf %28, %30 : vector<2x128xf32>
    %c0_14 = arith.constant 0 : index
    %c0_15 = arith.constant 0 : index
    %32 = vector.load %arg3[%c0_14, %c0_15] : memref<2x128xf32, #tpu.memory_space<vmem>>, vector<2x128xf32>
    tpu.vector_store %arg3[%c0_14, %c0_15], %31 {strides = array<i32>} : memref<2x128xf32, #tpu.memory_space<vmem>>, vector<2x128xf32>,
    return
  }
}

</mosaic_0001>

<llo_original>
// kernel: tpu_custom_call.1
$region0: #{tpu_custom_call.1}
  #allocation0 [shape = 'u32[]', space=smem, size = 0x4, offset = 0x4, fixed_abs, tag = 'smem constant byte address 0x4 - core index']
  #allocation1 [shape = 'u32[72,128]{1,0:T(1,128)}', space=vmem, size = 0x9000, scoped, tag = 'internal scratch']
  %s0 = inlined_call_operand.hbm [shape: f32[2,128], index: 0, kind: input, shape index: {}]
  %s1 = inlined_call_operand.hbm [shape: bf16[768,256], index: 1, kind: input, shape index: {}]
  %s2 = inlined_call_operand.hbm [shape: f32[8,256], index: 2, kind: input, shape index: {}]
  %s3 = inlined_call_operand.hbm [shape: f32[2,128], index: 3, kind: output, shape index: {}]
  %s4 = sld [smem:[#allocation0]]
  $region34: #{tpu_custom_call.1} parent=0
    _
  %s6 = ssub.s32 1, %s4
  %s7 = scalar_select 0, %s6, %s4
  $region1: #{tpu_custom_call.1} parent=0
    #allocation2 [shape = 'u8[1024]{0}', space=vmem, size = 0x400, scoped, tag = 'input window, operand 0, single buffered']
    #allocation3 [shape = 's32[1]{0}', space=sflag, size = 0x4, scoped, tag = 'scoped memory for tpu_custom_call.1']
    #allocation4 [shape = 's32[1]{0}', space=sflag, size = 0x4, scoped, tag = 'scoped memory for tpu_custom_call.1']
    #allocation5 [shape = 'u8[393216]{0}', space=vmem, size = 0x60000, scoped, tag = 'input window, operand 1, single buffered']
    #allocation6 [shape = 's32[1]{0}', space=sflag, size = 0x4, scoped, tag = 'scoped memory for tpu_custom_call.1']
    #allocation7 [shape = 'u8[8192]{0}', space=vmem, size = 0x2000, scoped, tag = 'input window, operand 2, single buffered']
    #allocation8 [shape = 'u8[1024]{0}', space=vmem, size = 0x400, scoped, tag = 'output window, operand 0, single buffered']
    %8 = vsyncpa [#allocation3], 0
    %9 = vsyncpa [#allocation6], 0
    %10 = vsyncpa [#allocation4], 0
    // Predicated region
    $region2: #{tpu_custom_call.1} parent=1 // pred_check
      _
    $region3: #{tpu_custom_call.1} parent=1 // pred_check_branch
      %12 = sbr.rel (0) target = $region5
    $region4: #{tpu_custom_call.1} parent=1 // pred_region
      %14 = vsyncadd [#allocation3], 0
      %s16 = sshll.u32 %s0, 4
      %s17 = int_to_ptr.hbm [resolvable:$true] %s16
      %s18 = sshll.u32 [#allocation2], 4
      %s19 = int_to_ptr.vmem [resolvable:$true] %s18
      %21 = dma.hbm_to_vmem [thread:$0]  %s17, 32, %s19, [#allocation3]
    $region5: #{tpu_custom_call.1} parent=1 // pred_fallthru
      _
    // Predicated region
    $region6: #{tpu_custom_call.1} parent=1 // pred_check
      _
    $region7: #{tpu_custom_call.1} parent=1 // pred_check_branch
      %23 = sbr.rel (0) target = $region9
    $region8: #{tpu_custom_call.1} parent=1 // pred_region
      %25 = vsyncadd [#allocation6], 0
      %s26 = sshll.u32 %s1, 4
      %s27 = int_to_ptr.hbm [resolvable:$true] %s26
      %s28 = sshll.u32 [#allocation5], 4
      %s29 = int_to_ptr.vmem [resolvable:$true] %s28
      %34 = dma.hbm_to_vmem [thread:$0]  %s27, 12288, %s29, [#allocation6], 128, 128, 8
    $region9: #{tpu_custom_call.1} parent=1 // pred_fallthru
      _
    // Predicated region
    $region10: #{tpu_custom_call.1} parent=1 // pred_check
      _
    $region11: #{tpu_custom_call.1} parent=1 // pred_check_branch
      %36 = sbr.rel (0) target = $region13
    $region12: #{tpu_custom_call.1} parent=1 // pred_region
      %38 = vsyncadd [#allocation6], 0
      %s40 = sshll.u32 %s2, 4
      %s41 = int_to_ptr.hbm [resolvable:$true] %s40
      %s42 = sshll.u32 [#allocation7], 4
      %s43 = int_to_ptr.vmem [resolvable:$true] %s42
      %45 = dma.hbm_to_vmem [thread:$0]  %s41, 256, %s43, [#allocation6]
    $region13: #{tpu_custom_call.1} parent=1 // pred_fallthru
      _
    // Predicated region
    $region14: #{tpu_custom_call.1} parent=1 // pred_check
      _
    $region15: #{tpu_custom_call.1} parent=1 // pred_check_branch
      %47 = sbr.rel (0) target = $region17
    $region16: #{tpu_custom_call.1} parent=1 // pred_region
      %49 = dma.done [#allocation3], 32
    $region17: #{tpu_custom_call.1} parent=1 // pred_fallthru
      _
    // Predicated region
    $region18: #{tpu_custom_call.1} parent=1 // pred_check
      _
    $region19: #{tpu_custom_call.1} parent=1 // pred_check_branch
      %51 = sbr.rel (0) target = $region21
    $region20: #{tpu_custom_call.1} parent=1 // pred_region
      %53 = dma.done [#allocation6], 12288
    $region21: #{tpu_custom_call.1} parent=1 // pred_fallthru
      _
    // Predicated region
    $region22: #{tpu_custom_call.1} parent=1 // pred_check
      _
    $region23: #{tpu_custom_call.1} parent=1 // pred_check_branch
      %55 = sbr.rel (0) target = $region25
    $region24: #{tpu_custom_call.1} parent=1 // pred_region
      %57 = dma.done [#allocation6], 256
    $region25: #{tpu_custom_call.1} parent=1 // pred_fallthru
      _
    %v58 = vld [vmem:[#allocation7] sm:$0xff]
    %v59 = vld [vmem:[#allocation7 + $0x8] sm:$0xff]
    %v60 = vld [vmem:[#allocation2] sm:$0x3]
    %v61 = vpack.c.bf16 %v60, %v60
    %v62 = vld [vmem:[#allocation5] sm:$0xff]
    %v63 = vld [vmem:[#allocation5 + $0x8] sm:$0xff]
    %v64 = vld [vmem:[#allocation5 + $0x10] sm:$0xff]
    %v65 = vld [vmem:[#allocation5 + $0x18] sm:$0xff]
    %v66 = vld [vmem:[#allocation5 + $0x20] sm:$0xff]
    %v67 = vld [vmem:[#allocation5 + $0x28] sm:$0xff]
    %v68 = vld [vmem:[#allocation5 + $0x30] sm:$0xff]
    %v69 = vld [vmem:[#allocation5 + $0x38] sm:$0xff]
    %v70 = vld [vmem:[#allocation5 + $0x40] sm:$0xff]
    %v71 = vld [vmem:[#allocation5 + $0x48] sm:$0xff]
    %v72 = vld [vmem:[#allocation5 + $0x50] sm:$0xff]
    %v73 = vld [vmem:[#allocation5 + $0x58] sm:$0xff]
    %v74 = vld [vmem:[#allocation5 + $0x60] sm:$0xff]
    %v75 = vld [vmem:[#allocation5 + $0x68] sm:$0xff]
    %v76 = vld [vmem:[#allocation5 + $0x70] sm:$0xff]
    %v77 = vld [vmem:[#allocation5 + $0x78] sm:$0xff]
    %v78 = vperm.slane %v58, 0
    %v79 = vperm.slane %v59, 0
    %v96 = vunpack.c.l.b16 %v62
    %v97 = vunpack.c.h.b16 %v62
    %v98 = vunpack.c.l.b16 %v63
    %v99 = vunpack.c.h.b16 %v63
    %v100 = vunpack.c.l.b16 %v64
    %v101 = vunpack.c.h.b16 %v64
    %v102 = vunpack.c.l.b16 %v65
    %v103 = vunpack.c.h.b16 %v65
    %v104 = vunpack.c.l.b16 %v66
    %v105 = vunpack.c.h.b16 %v66
    %v106 = vunpack.c.l.b16 %v67
    %v107 = vunpack.c.h.b16 %v67
    %v108 = vunpack.c.l.b16 %v68
    %v109 = vunpack.c.h.b16 %v68
    %v110 = vunpack.c.l.b16 %v69
    %v111 = vunpack.c.h.b16 %v69
    %v112 = vunpack.c.l.b16 %v70
    %v113 = vunpack.c.h.b16 %v70
    %v114 = vunpack.c.l.b16 %v71
    %v115 = vunpack.c.h.b16 %v71
    %v116 = vunpack.c.l.b16 %v72
    %v117 = vunpack.c.h.b16 %v72
    %v118 = vunpack.c.l.b16 %v73
    %v119 = vunpack.c.h.b16 %v73
    %v120 = vunpack.c.l.b16 %v74
    %v121 = vunpack.c.h.b16 %v74
    %v122 = vunpack.c.l.b16 %v75
    %v123 = vunpack.c.h.b16 %v75
    %v124 = vunpack.c.l.b16 %v76
    %v125 = vunpack.c.h.b16 %v76
    %v126 = vunpack.c.l.b16 %v77
    %v127 = vunpack.c.h.b16 %v77
    %v128 = vpack.c.b16 %v98, %v96
    %v129 = vpack.c.b16 %v99, %v97
    %v130 = vpack.c.b16 %v102, %v100
    %v131 = vpack.c.b16 %v103, %v101
    %v132 = vpack.c.b16 %v106, %v104
    %v133 = vpack.c.b16 %v107, %v105
    %v134 = vpack.c.b16 %v110, %v108
    %v135 = vpack.c.b16 %v111, %v109
    %v136 = vpack.c.b16 %v114, %v112
    %v137 = vpack.c.b16 %v115, %v113
    %v138 = vpack.c.b16 %v118, %v116
    %v139 = vpack.c.b16 %v119, %v117
    %v140 = vpack.c.b16 %v122, %v120
    %v141 = vpack.c.b16 %v123, %v121
    %v142 = vpack.c.b16 %v126, %v124
    %v143 = vpack.c.b16 %v127, %v125
    %160 = vmatpush.bf16.msra.mxu0 %v142
    %161 = vmatpush.bf16.msra.mxu0 %v140
    %162 = vmatpush.bf16.msra.mxu0 %v138
    %163 = vmatpush.bf16.msra.mxu0 %v136
    %164 = vmatpush.bf16.msra.mxu0 %v134
    %165 = vmatpush.bf16.msra.mxu0 %v132
    %166 = vmatpush.bf16.msra.mxu0 %v130
    %167 = vmatpush.bf16.msra.mxu0 %v128
    %168 = vmatmul.bf16.gmra.mxu0 %v61
    %v169 = vpop.f32.mrf.mxu0
    %v170 = vadd.f32 %v78, %v169
    %v171 = vpop.f32.mrf.mxu0
    %172 = vdwg.mxu0
    %173 = vmatpush.bf16.msra.mxu0 %v143
    %174 = vmatpush.bf16.msra.mxu0 %v141
    %175 = vmatpush.bf16.msra.mxu0 %v139
    %176 = vmatpush.bf16.msra.mxu0 %v137
    %177 = vmatpush.bf16.msra.mxu0 %v135
    %178 = vmatpush.bf16.msra.mxu0 %v133
    %179 = vmatpush.bf16.msra.mxu0 %v131
    %180 = vmatpush.bf16.msra.mxu0 %v129
    %181 = vmatmul.bf16.gmra.mxu0 %v61
    %v182 = vpop.f32.mrf.mxu0
    %v183 = vadd.f32 %v79, %v182
    %v184 = vpop.f32.mrf.mxu0
    %185 = vdwg.mxu0
    %v186 = vmax.f32 %v170, 0.0
    %v187 = vmax.f32 %v183, 0.0
    %v188 = vld [vmem:[#allocation5 + $0x80] sm:$0xff]
    %v189 = vld [vmem:[#allocation5 + $0x88] sm:$0xff]
    %v190 = vld [vmem:[#allocation5 + $0x90] sm:$0xff]
    %v191 = vld [vmem:[#allocation5 + $0x98] sm:$0xff]
    %v192 = vld [vmem:[#allocation5 + $0xa0] sm:$0xff]
    %v193 = vld [vmem:[#allocation5 + $0xa8] sm:$0xff]
    %v194 = vld [vmem:[#allocation5 + $0xb0] sm:$0xff]
    %v195 = vld [vmem:[#allocation5 + $0xb8] sm:$0xff]
    %v196 = vld [vmem:[#allocation5 + $0xc0] sm:$0xff]
    %v197 = vld [vmem:[#allocation5 + $0xc8] sm:$0xff]
    %v198 = vld [vmem:[#allocation5 + $0xd0] sm:$0xff]
    %v199 = vld [vmem:[#allocation5 + $0xd8] sm:$0xff]
    %v200 = vld [vmem:[#allocation5 + $0xe0] sm:$0xff]
    %v201 = vld [vmem:[#allocation5 + $0xe8] sm:$0xff]
    %v202 = vld [vmem:[#allocation5 + $0xf0] sm:$0xff]
    %v203 = vld [vmem:[#allocation5 + $0xf8] sm:$0xff]
    %v204 = vld [vmem:[#allocation5 + $0x100] sm:$0xff]
    %v205 = vld [vmem:[#allocation5 + $0x108] sm:$0xff]
    %v206 = vld [vmem:[#allocation5 + $0x110] sm:$0xff]
    %v207 = vld [vmem:[#allocation5 + $0x118] sm:$0xff]
    %v208 = vld [vmem:[#allocation5 + $0x120] sm:$0xff]
    %v209 = vld [vmem:[#allocation5 + $0x128] sm:$0xff]
    %v210 = vld [vmem:[#allocation5 + $0x130] sm:$0xff]
    %v211 = vld [vmem:[#allocation5 + $0x138] sm:$0xff]
    %v212 = vld [vmem:[#allocation5 + $0x140] sm:$0xff]
    %v213 = vld [vmem:[#allocation5 + $0x148] sm:$0xff]
    %v214 = vld [vmem:[#allocation5 + $0x150] sm:$0xff]
    %v215 = vld [vmem:[#allocation5 + $0x158] sm:$0xff]
    %v216 = vld [vmem:[#allocation5 + $0x160] sm:$0xff]
    %v217 = vld [vmem:[#allocation5 + $0x168] sm:$0xff]
    %v218 = vld [vmem:[#allocation5 + $0x170] sm:$0xff]
    %v219 = vld [vmem:[#allocation5 + $0x178] sm:$0xff]
    %v220 = vpack.c.bf16 %v186, %v186
    %v221 = vpack.c.bf16 %v187, %v187
    %v222 = vperm.slane %v58, 1
    %v223 = vperm.slane %v59, 1
    %v256 = vunpack.c.l.b16 %v188
    %v257 = vunpack.c.h.b16 %v188
    %v258 = vunpack.c.l.b16 %v189
    %v259 = vunpack.c.h.b16 %v189
    %v260 = vunpack.c.l.b16 %v190
    %v261 = vunpack.c.h.b16 %v190
    %v262 = vunpack.c.l.b16 %v191
    %v263 = vunpack.c.h.b16 %v191
    %v264 = vunpack.c.l.b16 %v192
    %v265 = vunpack.c.h.b16 %v192
    %v266 = vunpack.c.l.b16 %v193
    %v267 = vunpack.c.h.b16 %v193
    %v268 = vunpack.c.l.b16 %v194
    %v269 = vunpack.c.h.b16 %v194
    %v270 = vunpack.c.l.b16 %v195
    %v271 = vunpack.c.h.b16 %v195
    %v272 = vunpack.c.l.b16 %v196
    %v273 = vunpack.c.h.b16 %v196
    %v274 = vunpack.c.l.b16 %v197
    %v275 = vunpack.c.h.b16 %v197
    %v276 = vunpack.c.l.b16 %v198
    %v277 = vunpack.c.h.b16 %v198
    %v278 = vunpack.c.l.b16 %v199
    %v279 = vunpack.c.h.b16 %v199
    %v280 = vunpack.c.l.b16 %v200
    %v281 = vunpack.c.h.b16 %v200
    %v282 = vunpack.c.l.b16 %v201
    %v283 = vunpack.c.h.b16 %v201
    %v284 = vunpack.c.l.b16 %v202
    %v285 = vunpack.c.h.b16 %v202
    %v286 = vunpack.c.l.b16 %v203
    %v287 = vunpack.c.h.b16 %v203
    %v288 = vunpack.c.l.b16 %v204
    %v289 = vunpack.c.h.b16 %v204
    %v290 = vunpack.c.l.b16 %v205
    %v291 = vunpack.c.h.b16 %v205
    %v292 = vunpack.c.l.b16 %v206
    %v293 = vunpack.c.h.b16 %v206
    %v294 = vunpack.c.l.b16 %v207
    %v295 = vunpack.c.h.b16 %v207
    %v296 = vunpack.c.l.b16 %v208
    %v297 = vunpack.c.h.b16 %v208
    %v298 = vunpack.c.l.b16 %v209
    %v299 = vunpack.c.h.b16 %v209
    %v300 = vunpack.c.l.b16 %v210
    %v301 = vunpack.c.h.b16 %v210
    %v302 = vunpack.c.l.b16 %v211
    %v303 = vunpack.c.h.b16 %v211
    %v304 = vunpack.c.l.b16 %v212
    %v305 = vunpack.c.h.b16 %v212
    %v306 = vunpack.c.l.b16 %v213
    %v307 = vunpack.c.h.b16 %v213
    %v308 = vunpack.c.l.b16 %v214
    %v309 = vunpack.c.h.b16 %v214
    %v310 = vunpack.c.l.b16 %v215
    %v311 = vunpack.c.h.b16 %v215
    %v312 = vunpack.c.l.b16 %v216
    %v313 = vunpack.c.h.b16 %v216
    %v314 = vunpack.c.l.b16 %v217
    %v315 = vunpack.c.h.b16 %v217
    %v316 = vunpack.c.l.b16 %v218
    %v317 = vunpack.c.h.b16 %v218
    %v318 = vunpack.c.l.b16 %v219
    %v319 = vunpack.c.h.b16 %v219
    %v320 = vpack.c.b16 %v258, %v256
    %v321 = vpack.c.b16 %v259, %v257
    %v322 = vpack.c.b16 %v262, %v260
    %v323 = vpack.c.b16 %v263, %v261
    %v324 = vpack.c.b16 %v266, %v264
    %v325 = vpack.c.b16 %v267, %v265
    %v326 = vpack.c.b16 %v270, %v268
    %v327 = vpack.c.b16 %v271, %v269
    %v328 = vpack.c.b16 %v274, %v272
    %v329 = vpack.c.b16 %v275, %v273
    %v330 = vpack.c.b16 %v278, %v276
    %v331 = vpack.c.b16 %v279, %v277
    %v332 = vpack.c.b16 %v282, %v280
    %v333 = vpack.c.b16 %v283, %v281
    %v334 = vpack.c.b16 %v286, %v284
    %v335 = vpack.c.b16 %v287, %v285
    %v336 = vpack.c.b16 %v290, %v288
    %v337 = vpack.c.b16 %v291, %v289
    %v338 = vpack.c.b16 %v294, %v292
    %v339 = vpack.c.b16 %v295, %v293
    %v340 = vpack.c.b16 %v298, %v296
    %v341 = vpack.c.b16 %v299, %v297
    %v342 = vpack.c.b16 %v302, %v300
    %v343 = vpack.c.b16 %v303, %v301
    %v344 = vpack.c.b16 %v306, %v304
    %v345 = vpack.c.b16 %v307, %v305
    %v346 = vpack.c.b16 %v310, %v308
    %v347 = vpack.c.b16 %v311, %v309
    %v348 = vpack.c.b16 %v314, %v312
    %v349 = vpack.c.b16 %v315, %v313
    %v350 = vpack.c.b16 %v318, %v316
    %v351 = vpack.c.b16 %v319, %v317
    %384 = vmatpush.bf16.msra.mxu0 %v334
    %385 = vmatpush.bf16.msra.mxu0 %v332
    %386 = vmatpush.bf16.msra.mxu0 %v330
    %387 = vmatpush.bf16.msra.mxu0 %v328
    %388 = vmatpush.bf16.msra.mxu0 %v326
    %389 = vmatpush.bf16.msra.mxu0 %v324
    %390 = vmatpush.bf16.msra.mxu0 %v322
    %391 = vmatpush.bf16.msra.mxu0 %v320
    %392 = vmatmul.bf16.gmra.mxu0 %v220
    %v393 = vpop.f32.mrf.mxu0
    %v394 = vadd.f32 %v222, %v393
    %v395 = vpop.f32.mrf.mxu0
    %396 = vdwg.mxu0
    %397 = vmatpush.bf16.msra.mxu0 %v350
    %398 = vmatpush.bf16.msra.mxu0 %v348
    %399 = vmatpush.bf16.msra.mxu0 %v346
    %400 = vmatpush.bf16.msra.mxu0 %v344
    %401 = vmatpush.bf16.msra.mxu0 %v342
    %402 = vmatpush.bf16.msra.mxu0 %v340
    %403 = vmatpush.bf16.msra.mxu0 %v338
    %404 = vmatpush.bf16.msra.mxu0 %v336
    %405 = vmatmul.bf16.gmra.mxu0 %v221
    %v406 = vpop.f32.mrf.mxu0
    %v407 = vadd.f32 %v394, %v406
    %v408 = vpop.f32.mrf.mxu0
    %409 = vdwg.mxu0
    %410 = vmatpush.bf16.msra.mxu0 %v335
    %411 = vmatpush.bf16.msra.mxu0 %v333
    %412 = vmatpush.bf16.msra.mxu0 %v331
    %413 = vmatpush.bf16.msra.mxu0 %v329
    %414 = vmatpush.bf16.msra.mxu0 %v327
    %415 = vmatpush.bf16.msra.mxu0 %v325
    %416 = vmatpush.bf16.msra.mxu0 %v323
    %417 = vmatpush.bf16.msra.mxu0 %v321
    %418 = vmatmul.bf16.gmra.mxu0 %v220
    %v419 = vpop.f32.mrf.mxu0
    %v420 = vadd.f32 %v223, %v419
    %v421 = vpop.f32.mrf.mxu0
    %422 = vdwg.mxu0
    %423 = vmatpush.bf16.msra.mxu0 %v351
    %424 = vmatpush.bf16.msra.mxu0 %v349
    %425 = vmatpush.bf16.msra.mxu0 %v347
    %426 = vmatpush.bf16.msra.mxu0 %v345
    %427 = vmatpush.bf16.msra.mxu0 %v343
    %428 = vmatpush.bf16.msra.mxu0 %v341
    %429 = vmatpush.bf16.msra.mxu0 %v339
    %430 = vmatpush.bf16.msra.mxu0 %v337
    %431 = vmatmul.bf16.gmra.mxu0 %v221
    %v432 = vpop.f32.mrf.mxu0
    %v433 = vadd.f32 %v420, %v432
    %v434 = vpop.f32.mrf.mxu0
    %435 = vdwg.mxu0
    %v436 = vmax.f32 %v407, 0.0
    %v437 = vmax.f32 %v433, 0.0
    %v438 = vld [vmem:[#allocation5 + $0x180] sm:$0xf]
    %v439 = vld [vmem:[#allocation5 + $0x188] sm:$0xf]
    %v440 = vld [vmem:[#allocation5 + $0x190] sm:$0xf]
    %v441 = vld [vmem:[#allocation5 + $0x198] sm:$0xf]
    %v442 = vld [vmem:[#allocation5 + $0x1a0] sm:$0xf]
    %v443 = vld [vmem:[#allocation5 + $0x1a8] sm:$0xf]
    %v444 = vld [vmem:[#allocation5 + $0x1b0] sm:$0xf]
    %v445 = vld [vmem:[#allocation5 + $0x1b8] sm:$0xf]
    %v446 = vld [vmem:[#allocation5 + $0x1c0] sm:$0xf]
    %v447 = vld [vmem:[#allocation5 + $0x1c8] sm:$0xf]
    %v448 = vld [vmem:[#allocation5 + $0x1d0] sm:$0xf]
    %v449 = vld [vmem:[#allocation5 + $0x1d8] sm:$0xf]
    %v450 = vld [vmem:[#allocation5 + $0x1e0] sm:$0xf]
    %v451 = vld [vmem:[#allocation5 + $0x1e8] sm:$0xf]
    %v452 = vld [vmem:[#allocation5 + $0x1f0] sm:$0xf]
    %v453 = vld [vmem:[#allocation5 + $0x1f8] sm:$0xf]
    %v454 = vld [vmem:[#allocation5 + $0x200] sm:$0xf]
    %v455 = vld [vmem:[#allocation5 + $0x208] sm:$0xf]
    %v456 = vld [vmem:[#allocation5 + $0x210] sm:$0xf]
    %v457 = vld [vmem:[#allocation5 + $0x218] sm:$0xf]
    %v458 = vld [vmem:[#allocation5 + $0x220] sm:$0xf]
    %v459 = vld [vmem:[#allocation5 + $0x228] sm:$0xf]
    %v460 = vld [vmem:[#allocation5 + $0x230] sm:$0xf]
    %v461 = vld [vmem:[#allocation5 + $0x238] sm:$0xf]
    %v462 = vld [vmem:[#allocation5 + $0x240] sm:$0xf]
    %v463 = vld [vmem:[#allocation5 + $0x248] sm:$0xf]
    %v464 = vld [vmem:[#allocation5 + $0x250] sm:$0xf]
    %v465 = vld [vmem:[#allocation5 + $0x258] sm:$0xf]
    %v466 = vld [vmem:[#allocation5 + $0x260] sm:$0xf]
    %v467 = vld [vmem:[#allocation5 + $0x268] sm:$0xf]
    %v468 = vld [vmem:[#allocation5 + $0x270] sm:$0xf]
    %v469 = vld [vmem:[#allocation5 + $0x278] sm:$0xf]
    %v470 = vpack.c.bf16 %v436, %v436
    %v471 = vpack.c.bf16 %v437, %v437
    %v472 = vperm.slane %v58, 2
    %v505 = vunpack.c.l.b16 %v438
    %v506 = vunpack.c.l.b16 %v439
    %v507 = vunpack.c.l.b16 %v440
    %v508 = vunpack.c.l.b16 %v441
    %v509 = vunpack.c.l.b16 %v442
    %v510 = vunpack.c.l.b16 %v443
    %v511 = vunpack.c.l.b16 %v444
    %v512 = vunpack.c.l.b16 %v445
    %v513 = vunpack.c.l.b16 %v446
    %v514 = vunpack.c.l.b16 %v447
    %v515 = vunpack.c.l.b16 %v448
    %v516 = vunpack.c.l.b16 %v449
    %v517 = vunpack.c.l.b16 %v450
    %v518 = vunpack.c.l.b16 %v451
    %v519 = vunpack.c.l.b16 %v452
    %v520 = vunpack.c.l.b16 %v453
    %v521 = vunpack.c.l.b16 %v454
    %v522 = vunpack.c.l.b16 %v455
    %v523 = vunpack.c.l.b16 %v456
    %v524 = vunpack.c.l.b16 %v457
    %v525 = vunpack.c.l.b16 %v458
    %v526 = vunpack.c.l.b16 %v459
    %v527 = vunpack.c.l.b16 %v460
    %v528 = vunpack.c.l.b16 %v461
    %v529 = vunpack.c.l.b16 %v462
    %v530 = vunpack.c.l.b16 %v463
    %v531 = vunpack.c.l.b16 %v464
    %v532 = vunpack.c.l.b16 %v465
    %v533 = vunpack.c.l.b16 %v466
    %v534 = vunpack.c.l.b16 %v467
    %v535 = vunpack.c.l.b16 %v468
    %v536 = vunpack.c.l.b16 %v469
    %v537 = vpack.c.b16 %v506, %v505
    %v538 = vpack.c.b16 %v508, %v507
    %v539 = vpack.c.b16 %v510, %v509
    %v540 = vpack.c.b16 %v512, %v511
    %v541 = vpack.c.b16 %v514, %v513
    %v542 = vpack.c.b16 %v516, %v515
    %v543 = vpack.c.b16 %v518, %v517
    %v544 = vpack.c.b16 %v520, %v519
    %v545 = vpack.c.b16 %v522, %v521
    %v546 = vpack.c.b16 %v524, %v523
    %v547 = vpack.c.b16 %v526, %v525
    %v548 = vpack.c.b16 %v528, %v527
    %v549 = vpack.c.b16 %v530, %v529
    %v550 = vpack.c.b16 %v532, %v531
    %v551 = vpack.c.b16 %v534, %v533
    %v552 = vpack.c.b16 %v536, %v535
    %569 = vmatpush.bf16.msra.mxu0 %v544
    %570 = vmatpush.bf16.msra.mxu0 %v543
    %571 = vmatpush.bf16.msra.mxu0 %v542
    %572 = vmatpush.bf16.msra.mxu0 %v541
    %573 = vmatpush.bf16.msra.mxu0 %v540
    %574 = vmatpush.bf16.msra.mxu0 %v539
    %575 = vmatpush.bf16.msra.mxu0 %v538
    %576 = vmatpush.bf16.msra.mxu0 %v537
    %577 = vmatmul.bf16.gmra.mxu0 %v470
    %v578 = vpop.f32.mrf.mxu0
    %v579 = vadd.f32 %v472, %v578
    %v580 = vpop.f32.mrf.mxu0
    %581 = vdwg.mxu0
    %582 = vmatpush.bf16.msra.mxu0 %v552
    %583 = vmatpush.bf16.msra.mxu0 %v551
    %584 = vmatpush.bf16.msra.mxu0 %v550
    %585 = vmatpush.bf16.msra.mxu0 %v549
    %586 = vmatpush.bf16.msra.mxu0 %v548
    %587 = vmatpush.bf16.msra.mxu0 %v547
    %588 = vmatpush.bf16.msra.mxu0 %v546
    %589 = vmatpush.bf16.msra.mxu0 %v545
    %590 = vmatmul.bf16.gmra.mxu0 %v471
    %v591 = vpop.f32.mrf.mxu0
    %v592 = vadd.f32 %v579, %v591
    %v593 = vpop.f32.mrf.mxu0
    %594 = vdwg.mxu0
    %v595 = vmax.f32 %v592, 0.0
    %v596 = vld [vmem:[#allocation5 + $0x280] sm:$0xf]
    %v597 = vld [vmem:[#allocation5 + $0x288] sm:$0xf]
    %v598 = vld [vmem:[#allocation5 + $0x290] sm:$0xf]
    %v599 = vld [vmem:[#allocation5 + $0x298] sm:$0xf]
    %v600 = vld [vmem:[#allocation5 + $0x2a0] sm:$0xf]
    %v601 = vld [vmem:[#allocation5 + $0x2a8] sm:$0xf]
    %v602 = vld [vmem:[#allocation5 + $0x2b0] sm:$0xf]
    %v603 = vld [vmem:[#allocation5 + $0x2b8] sm:$0xf]
    %v604 = vld [vmem:[#allocation5 + $0x2c0] sm:$0xf]
    %v605 = vld [vmem:[#allocation5 + $0x2c8] sm:$0xf]
    %v606 = vld [vmem:[#allocation5 + $0x2d0] sm:$0xf]
    %v607 = vld [vmem:[#allocation5 + $0x2d8] sm:$0xf]
    %v608 = vld [vmem:[#allocation5 + $0x2e0] sm:$0xf]
    %v609 = vld [vmem:[#allocation5 + $0x2e8] sm:$0xf]
    %v610 = vld [vmem:[#allocation5 + $0x2f0] sm:$0xf]
    %v611 = vld [vmem:[#allocation5 + $0x2f8] sm:$0xf]
    %v612 = vpack.c.bf16 %v595, %v595
    %v613 = vperm.slane %v58, 3
    %v630 = vunpack.c.l.b16 %v596
    %v631 = vunpack.c.l.b16 %v597
    %v632 = vunpack.c.l.b16 %v598
    %v633 = vunpack.c.l.b16 %v599
    %v634 = vunpack.c.l.b16 %v600
    %v635 = vunpack.c.l.b16 %v601
    %v636 = vunpack.c.l.b16 %v602
    %v637 = vunpack.c.l.b16 %v603
    %v638 = vunpack.c.l.b16 %v604
    %v639 = vunpack.c.l.b16 %v605
    %v640 = vunpack.c.l.b16 %v606
    %v641 = vunpack.c.l.b16 %v607
    %v642 = vunpack.c.l.b16 %v608
    %v643 = vunpack.c.l.b16 %v609
    %v644 = vunpack.c.l.b16 %v610
    %v645 = vunpack.c.l.b16 %v611
    %v646 = vpack.c.b16 %v631, %v630
    %v647 = vpack.c.b16 %v633, %v632
    %v648 = vpack.c.b16 %v635, %v634
    %v649 = vpack.c.b16 %v637, %v636
    %v650 = vpack.c.b16 %v639, %v638
    %v651 = vpack.c.b16 %v641, %v640
    %v652 = vpack.c.b16 %v643, %v642
    %v653 = vpack.c.b16 %v645, %v644
    %662 = vmatpush.bf16.msra.mxu0 %v653
    %663 = vmatpush.bf16.msra.mxu0 %v652
    %664 = vmatpush.bf16.msra.mxu0 %v651
    %665 = vmatpush.bf16.msra.mxu0 %v650
    %666 = vmatpush.bf16.msra.mxu0 %v649
    %667 = vmatpush.bf16.msra.mxu0 %v648
    %668 = vmatpush.bf16.msra.mxu0 %v647
    %669 = vmatpush.bf16.msra.mxu0 %v646
    %670 = vmatmul.bf16.gmra.mxu0 %v612
    %v671 = vpop.f32.mrf.mxu0
    %v672 = vadd.f32 %v613, %v671
    %v673 = vpop.f32.mrf.mxu0
    %674 = vdwg.mxu0
    %675 = vst [vmem:[#allocation8] sm:$0x3] %v672
    // Predicated region
    $region26: #{tpu_custom_call.1} parent=1 // pred_check
      _
    $region27: #{tpu_custom_call.1} parent=1 // pred_check_branch
      %677 = sbr.rel (0) target = $region29
    $region28: #{tpu_custom_call.1} parent=1 // pred_region
      %679 = vsyncadd [#allocation4], 0
      %s681 = sshll.u32 [#allocation8], 4
      %s682 = int_to_ptr.vmem [resolvable:$true] %s681
      %s683 = sshll.u32 %s3, 4
      %s684 = int_to_ptr.hbm [resolvable:$true] %s683
      %686 = dma.vmem_to_hbm [thread:$0]  %s682, 32, %s684, [#allocation4]
    $region29: #{tpu_custom_call.1} parent=1 // pred_fallthru
      _
    // Predicated region
    $region30: #{tpu_custom_call.1} parent=1 // pred_check
      _
    $region31: #{tpu_custom_call.1} parent=1 // pred_check_branch
      %688 = sbr.rel (0) target = $region33
    $region32: #{tpu_custom_call.1} parent=1 // pred_region
      %690 = dma.done [#allocation4], 32
    $region33: #{tpu_custom_call.1} parent=1 // pred_fallthru
      _
    %691 = vsyncpa [#allocation3], 1
    %692 = vsyncpa [#allocation6], 1
    %693 = vsyncpa [#allocation4], 1

</llo_original>
